<compile_context>
chip_gen: v6e
topology: v6e:2x2x1
jax: 0.10.0
libtpu: 0.0.40
codegen_flags: <defaults>
</compile_context>

<pallas_src>
import functools

import jax
import jax.numpy as jnp
from jax.experimental import pallas as pl
from jax.experimental.pallas import tpu as pltpu


# ---------------------------------------------------------------------------
# Helpers
# ---------------------------------------------------------------------------

def _round_down(v: int, m: int) -> int:
    return (v // m) * m


def _round_up(v: int, m: int) -> int:
    return ((v + m - 1) // m) * m


def _usable_vmem_bytes() -> int:
    """~3/4 of physical VMEM (≈96 MiB on v5e/v6e, ≈48 MiB on v7x)."""
    try:
        cap = int(pltpu.get_tpu_info().vmem_capacity_bytes)
    except Exception:
        cap = 64 << 20  # conservative fallback (v7x per-TensorCore VMEM)
    return max(32 << 20, (cap * 3) // 4)


def _ensure_two_blocks(rows: int, block_rows: int, sublane: int) -> int:
    """If the whole problem fits in one row block, halve it so the 'parallel'
    grid axis has >=2 steps (engages both v7x TensorCores; no-op elsewhere)."""
    if -(-rows // block_rows) == 1 and rows > sublane:
        half = _round_down(block_rows // 2, sublane)
        if half >= sublane:
            return half
    return block_rows


# ---------------------------------------------------------------------------
# Path 1: full H*W per block, single fused pass (the common case)
# ---------------------------------------------------------------------------

def _instnorm_fused_kernel(x_ref, w_ref, b_ref, o_ref, *, eps, inv_hw,
                           block_rows, resident_params, centered_variance):
    # x_ref: (block_rows, HW) -- one row per (sample, channel) instance.
    # w_ref/b_ref: resident (rows_padded, 1) column, or per-block (block_rows, 1).
    if resident_params:
        r0 = pl.multiple_of(pl.program_id(0) * block_rows, block_rows)
        wv = w_ref[pl.ds(r0, block_rows), :].astype(jnp.float32)
        bv = b_ref[pl.ds(r0, block_rows), :].astype(jnp.float32)
    else:
        wv = w_ref[...].astype(jnp.float32)
        bv = b_ref[...].astype(jnp.float32)

    x = x_ref[...].astype(jnp.float32)
    mean = jnp.sum(x, axis=-1, keepdims=True) * inv_hw
    if centered_variance:
        cent = x - mean
        var = jnp.sum(cent * cent, axis=-1, keepdims=True) * inv_hw
    else:
        # One-pass variance: fewer VPU ops / one less full-tile f32 temp.
        var = jnp.sum(x * x, axis=-1, keepdims=True) * inv_hw - mean * mean
        var = jnp.maximum(var, 0.0)
    # Fused affine: y = x * scale + shift   (2 VPU ops per element)
    scale = jax.lax.rsqrt(var + eps) * wv
    shift = bv - mean * scale
    o_ref[...] = (x * scale + shift).astype(o_ref.dtype)


def _instance_norm_rows(x2, w_rows, b_rows, *, eps, hw, block_rows,
                        centered_variance, sublane, itemsize, budget, usable):
    rows = x2.shape[0]
    # VMEM working set per row: double-buffered input + double-buffered output
    # + ~3 full-tile f32 intermediates inside the kernel body.
    ws_per_row = hw * (4 * itemsize + 12)

    if block_rows is None:
        if rows <= sublane:
            block_rows = rows
        else:
            block_rows = max(sublane, _round_down(budget // ws_per_row, sublane))
            block_rows = min(block_rows, _round_down(rows, sublane))
    block_rows = _ensure_two_blocks(rows, block_rows, sublane)
    num_blocks = pl.cdiv(rows, block_rows)
    rows_padded = num_blocks * block_rows

    # Weight/bias residency: load the whole (rows_padded, 1) column once and
    # slice per row block in-kernel (removes 2 tiny DMAs per grid step).  Lane
    # padding makes the resident copy ~rows_padded*512 B per array, so only do
    # it when small; with a single row block the per-block spec is equivalent.
    resident = (num_blocks > 1) and (rows_padded * 1024 <= (2 << 20))
    if resident:
        if rows_padded != rows:
            pad = rows_padded - rows
            w_rows = jnp.pad(w_rows, ((0, pad), (0, 0)))
            b_rows = jnp.pad(b_rows, ((0, pad), (0, 0)))
        w_spec = pl.BlockSpec((rows_padded, 1), lambda i: (0, 0))
        b_spec = pl.BlockSpec((rows_padded, 1), lambda i: (0, 0))
    else:
        w_spec = pl.BlockSpec((block_rows, 1), lambda i: (i, 0))
        b_spec = pl.BlockSpec((block_rows, 1), lambda i: (i, 0))

    kernel = functools.partial(
        _instnorm_fused_kernel, eps=eps, inv_hw=1.0 / hw, block_rows=block_rows,
        resident_params=resident, centered_variance=centered_variance)

    return pl.pallas_call(
        kernel,
        out_shape=jax.ShapeDtypeStruct((rows, hw), x2.dtype),
        grid_spec=pltpu.PrefetchScalarGridSpec(
            num_scalar_prefetch=0,
            grid=(num_blocks,),
            in_specs=[pl.BlockSpec((block_rows, hw), lambda i: (i, 0)),
                      w_spec, b_spec],
            out_specs=pl.BlockSpec((block_rows, hw), lambda i: (i, 0)),
        ),
        compiler_params=pltpu.CompilerParams(
            dimension_semantics=("parallel",),
            vmem_limit_bytes=usable,
        ),
    )(x2, w_rows, b_rows)


# ---------------------------------------------------------------------------
# Path 2: spatial (H*W) tiling — two passes (stats, then normalize)
# ---------------------------------------------------------------------------

def _instnorm_stats_kernel(x_ref, w_ref, b_ref, scale_ref, shift_ref, *,
                           eps, inv_hw, hw, block_hw, needs_mask):
    # Accumulate sum(x) / sum(x^2) into the (block_rows, 1) output buffers
    # across the HW axis, then overwrite them with fused (scale, shift).
    j = pl.program_id(1)

    @pl.when(j == 0)
    def _():
        scale_ref[...] = jnp.zeros_like(scale_ref)   # running sum(x)
        shift_ref[...] = jnp.zeros_like(shift_ref)   # running sum(x*x)

    x = x_ref[...].astype(jnp.float32)
    if needs_mask:
        # Last HW block may be partial: zero out-of-range lanes before summing.
        col = jax.lax.broadcasted_iota(jnp.int32, x.shape, 1) + j * block_hw
        x = jnp.where(col < hw, x, 0.0)
    scale_ref[...] += jnp.sum(x, axis=-1, keepdims=True)
    shift_ref[...] += jnp.sum(x * x, axis=-1, keepdims=True)

    @pl.when(j == pl.num_programs(1) - 1)
    def _():
        mean = scale_ref[...] * inv_hw
        var = jnp.maximum(shift_ref[...] * inv_hw - mean * mean, 0.0)
        sc = jax.lax.rsqrt(var + eps) * w_ref[...].astype(jnp.float32)
        scale_ref[...] = sc
        shift_ref[...] = b_ref[...].astype(jnp.float32) - mean * sc


def _instnorm_apply_kernel(x_ref, scale_ref, shift_ref, o_ref):
    x = x_ref[...].astype(jnp.float32)
    o_ref[...] = (x * scale_ref[...] + shift_ref[...]).astype(o_ref.dtype)


def _instance_norm_rows_tiled(x2, w_rows, b_rows, *, eps, hw, block_rows,
                              block_hw, sublane, itemsize, budget, usable):
    rows = x2.shape[0]
    ws_per_elem = 4 * itemsize + 12

    if block_rows is None:
        block_rows = rows if rows <= sublane else min(_round_down(rows, sublane), 64)
    block_rows = _ensure_two_blocks(rows, block_rows, sublane)
    num_row_blocks = pl.cdiv(rows, block_rows)

    if block_hw is None:
        elems = max(128 * block_rows, budget // ws_per_elem)
        block_hw = max(128, _round_down(elems // block_rows, 128))
    if block_hw % 128 != 0:
        block_hw = _round_up(block_hw, 128)
    block_hw = min(block_hw, _round_up(hw, 128))
    num_hw_blocks = pl.cdiv(hw, block_hw)
    needs_mask = (hw % block_hw) != 0

    # Pass A: per-row statistics -> fused (scale, shift), (rows, 1) each in f32.
    stats_kernel = functools.partial(
        _instnorm_stats_kernel, eps=eps, inv_hw=1.0 / hw, hw=hw,
        block_hw=block_hw, needs_mask=needs_mask)
    scale, shift = pl.pallas_call(
        stats_kernel,
        out_shape=(jax.ShapeDtypeStruct((rows, 1), jnp.float32),
                   jax.ShapeDtypeStruct((rows, 1), jnp.float32)),
        grid_spec=pltpu.PrefetchScalarGridSpec(
            num_scalar_prefetch=0,
            grid=(num_row_blocks, num_hw_blocks),
            in_specs=[
                pl.BlockSpec((block_rows, block_hw), lambda i, j: (i, j)),
                pl.BlockSpec((block_rows, 1), lambda i, j: (i, 0)),
                pl.BlockSpec((block_rows, 1), lambda i, j: (i, 0)),
            ],
            out_specs=(
                pl.BlockSpec((block_rows, 1), lambda i, j: (i, 0)),
                pl.BlockSpec((block_rows, 1), lambda i, j: (i, 0)),
            ),
        ),
        compiler_params=pltpu.CompilerParams(
            dimension_semantics=("parallel", "arbitrary"),
            vmem_limit_bytes=usable,
        ),
    )(x2, w_rows, b_rows)

    # Pass B: fully parallel normalize y = x*scale + shift.
    return pl.pallas_call(
        _instnorm_apply_kernel,
        out_shape=jax.ShapeDtypeStruct((rows, hw), x2.dtype),
        grid_spec=pltpu.PrefetchScalarGridSpec(
            num_scalar_prefetch=0,
            grid=(num_row_blocks, num_hw_blocks),
            in_specs=[
                pl.BlockSpec((block_rows, block_hw), lambda i, j: (i, j)),
                pl.BlockSpec((block_rows, 1), lambda i, j: (i, 0)),
                pl.BlockSpec((block_rows, 1), lambda i, j: (i, 0)),
            ],
            out_specs=pl.BlockSpec((block_rows, block_hw), lambda i, j: (i, j)),
        ),
        compiler_params=pltpu.CompilerParams(
            dimension_semantics=("parallel", "parallel"),
            vmem_limit_bytes=usable,
        ),
    )(x2, scale, shift)


# ---------------------------------------------------------------------------
# Public wrapper
# ---------------------------------------------------------------------------

def instance_norm(x, weight=None, bias=None, *, eps: float = 1e-5,
                  block_rows=None, block_hw=None, centered_variance=False):
    """InstanceNorm2d forward. x: (N, C, H, W); weight/bias: (C,) or None."""
    n, c, h, w = x.shape
    rows, hw = n * c, h * w

    if weight is None:
        weight = jnp.ones((c,), x.dtype)
    if bias is None:
        bias = jnp.zeros((c,), x.dtype)

    itemsize = jnp.dtype(x.dtype).itemsize
    sublane = max(8, 32 // itemsize)       # 8 for f32, 16 for bf16, 32 for int8
    usable = _usable_vmem_bytes()          # scoped-VMEM ceiling for this kernel
    budget = (usable * 7) // 10            # working-set target (headroom for temps)
    ws_per_elem = 4 * itemsize + 12        # in/out double-buffered + f32 temps

    # TODO(synk): for hw < 128 every store is a masked vst (lane utilization
    # <1 vreg); a rows->lanes repack or zero-pad of the lane axis would help,
    # but the extra HBM pad/slice pass usually costs more than it saves.
    x2 = x.reshape(rows, hw)
    # Broadcast per-channel affine params to per-row (N*C, 1) columns (tiny).
    w_rows = jnp.broadcast_to(weight.reshape(1, c), (n, c)).reshape(rows, 1)
    b_rows = jnp.broadcast_to(bias.reshape(1, c), (n, c)).reshape(rows, 1)

    # Dispatch: if even a minimum-height full-HW block blows the VMEM budget
    # (large spatial maps), use the spatially tiled two-pass path.
    spatial_tiling = (block_hw is not None and block_hw < hw) or (
        block_hw is None and min(rows, sublane) * hw * ws_per_elem > budget)

    if spatial_tiling:
        out2 = _instance_norm_rows_tiled(
            x2, w_rows, b_rows, eps=eps, hw=hw, block_rows=block_rows,
            block_hw=block_hw, sublane=sublane, itemsize=itemsize,
            budget=budget, usable=usable)
    else:
        out2 = _instance_norm_rows(
            x2, w_rows, b_rows, eps=eps, hw=hw, block_rows=block_rows,
            centered_variance=centered_variance, sublane=sublane,
            itemsize=itemsize, budget=budget, usable=usable)
    return out2.reshape(n, c, h, w)


def instance_norm_ref(x, weight, bias, eps=1e-5):
    xf = x.astype(jnp.float32)
    mean = jnp.mean(xf, axis=(2, 3), keepdims=True)
    var = jnp.mean((xf - mean) ** 2, axis=(2, 3), keepdims=True)
    y = (xf - mean) / jnp.sqrt(var + eps)
    y = y * weight.reshape(1, -1, 1, 1) + bias.reshape(1, -1, 1, 1)
    return y.astype(x.dtype)


if __name__ == "__main__":
    key = jax.random.PRNGKey(0)

    # Case 1: small NCHW, fused single-pass path, single row block.
    N, C, H, W = 2, 4, 16, 16
    x = jax.random.normal(key, (N, C, H, W), dtype=jnp.float32)
    # Deterministic parameter init matching reset_parameters(): ones / zeros.
    weight = jnp.ones((C,), dtype=jnp.float32)
    bias = jnp.zeros((C,), dtype=jnp.float32)
    out = jax.block_until_ready(instance_norm(x, weight, bias, eps=1e-5))
    ref = instance_norm_ref(x, weight, bias, eps=1e-5)
    assert out.shape == (N, C, H, W)
    assert jnp.allclose(out, ref, atol=1e-4, rtol=1e-4)

    # Case 2: N*C not a multiple of the row block (partial last block) and
    # VMEM-resident weight/bias path.
    x2 = jax.random.normal(jax.random.PRNGKey(1), (3, 4, H, W), dtype=jnp.float32)
    w2 = jnp.ones((4,), dtype=jnp.float32)
    b2 = jnp.zeros((4,), dtype=jnp.float32)
    out2 = jax.block_until_ready(instance_norm(x2, w2, b2, eps=1e-5))
    ref2 = instance_norm_ref(x2, w2, b2, eps=1e-5)
    assert jnp.allclose(out2, ref2, atol=1e-4, rtol=1e-4)

    # Case 3: force the spatially tiled (two-pass) path at a small shape, with
    # H*W = 324 (not a multiple of 128) to exercise the lane mask, and a
    # non-trivial affine transform.
    x3 = jax.random.normal(jax.random.PRNGKey(2), (2, 3, 18, 18), dtype=jnp.float32)
    w3 = jax.random.normal(jax.random.PRNGKey(3), (3,), dtype=jnp.float32)
    b3 = jax.random.normal(jax.random.PRNGKey(4), (3,), dtype=jnp.float32)
    out3 = jax.block_until_ready(instance_norm(x3, w3, b3, eps=1e-5, block_hw=128))
    ref3 = instance_norm_ref(x3, w3, b3, eps=1e-5)
    assert jnp.allclose(out3, ref3, atol=1e-4, rtol=1e-4)

    print("KERNEL_OK")
</pallas_src>

<mosaic_0001>
module attributes {stable_mosaic.version = 11 : i64} {
  func.func @_instnorm_fused_kernel(%arg0: i32, %arg1: memref<8x256xf32, #tpu.memory_space<vmem>>, %arg2: memref<8x1xf32, #tpu.memory_space<vmem>>, %arg3: memref<8x1xf32, #tpu.memory_space<vmem>>, %arg4: memref<8x256xf32, #tpu.memory_space<vmem>>) attributes {dimension_semantics = [#tpu.dimension_semantics<parallel>], iteration_bounds = array<i64: 1>, scalar_prefetch = 0 : i64, scratch_operands = 0 : i64, tpu.core_type = #tpu.core_type<tc>, window_params = [{transform_indices = @transform_0, window_bounds = array<i64: 8, 256>}, {transform_indices = @transform_1, window_bounds = array<i64: 8, 1>}, {transform_indices = @transform_2, window_bounds = array<i64: 8, 1>}, {transform_indices = @transform_3, window_bounds = array<i64: 8, 256>}]} {
    %c0 = arith.constant 0 : index
    %c0_0 = arith.constant 0 : index
    %0 = vector.load %arg2[%c0, %c0_0] : memref<8x1xf32, #tpu.memory_space<vmem>>, vector<8x1xf32>
    %c0_1 = arith.constant 0 : index
    %c0_2 = arith.constant 0 : index
    %1 = vector.load %arg3[%c0_1, %c0_2] : memref<8x1xf32, #tpu.memory_space<vmem>>, vector<8x1xf32>
    %c0_3 = arith.constant 0 : index
    %c0_4 = arith.constant 0 : index
    %2 = vector.load %arg1[%c0_3, %c0_4] : memref<8x256xf32, #tpu.memory_space<vmem>>, vector<8x256xf32>
    %cst = arith.constant dense<0.000000e+00> : vector<8xf32>
    %3 = vector.multi_reduction <add>, %2, %cst [1] : vector<8x256xf32> to vector<8xf32>
    %4 = vector.shape_cast %3 : vector<8xf32> to vector<8x1xf32>
    %cst_5 = arith.constant 3.906250e-03 : f32
    %5 = vector.broadcast %cst_5 : f32 to vector<8x1xf32>
    %6 = arith.mulf %4, %5 : vector<8x1xf32>
    %7 = arith.mulf %2, %2 : vector<8x256xf32>
    %cst_6 = arith.constant dense<0.000000e+00> : vector<8xf32>
    %8 = vector.multi_reduction <add>, %7, %cst_6 [1] : vector<8x256xf32> to vector<8xf32>
    %9 = vector.shape_cast %8 : vector<8xf32> to vector<8x1xf32>
    %cst_7 = arith.constant 3.906250e-03 : f32
    %10 = vector.broadcast %cst_7 : f32 to vector<8x1xf32>
    %11 = arith.mulf %9, %10 : vector<8x1xf32>
    %12 = arith.mulf %6, %6 : vector<8x1xf32>
    %13 = arith.subf %11, %12 : vector<8x1xf32>
    %cst_8 = arith.constant 0.000000e+00 : f32
    %14 = vector.broadcast %cst_8 : f32 to vector<8x1xf32>
    %15 = arith.maximumf %13, %14 : vector<8x1xf32>
    %cst_9 = arith.constant 9.99999974E-6 : f32
    %16 = vector.broadcast %cst_9 : f32 to vector<8x1xf32>
    %17 = arith.addf %15, %16 : vector<8x1xf32>
    %18 = math.rsqrt %17 : vector<8x1xf32>
    %19 = arith.mulf %18, %0 : vector<8x1xf32>
    %20 = arith.mulf %6, %19 : vector<8x1xf32>
    %21 = arith.subf %1, %20 : vector<8x1xf32>
    %22 = vector.broadcast %19 : vector<8x1xf32> to vector<8x256xf32>
    %23 = arith.mulf %2, %22 : vector<8x256xf32>
    %24 = vector.broadcast %21 : vector<8x1xf32> to vector<8x256xf32>
    %25 = arith.addf %23, %24 : vector<8x256xf32>
    %c0_10 = arith.constant 0 : index
    %c0_11 = arith.constant 0 : index
    %26 = vector.load %arg4[%c0_10, %c0_11] : memref<8x256xf32, #tpu.memory_space<vmem>>, vector<8x256xf32>
    tpu.vector_store %arg4[%c0_10, %c0_11], %25 {strides = array<i32>} : memref<8x256xf32, #tpu.memory_space<vmem>>, vector<8x256xf32>,
    return
  }
  func.func @transform_0(%arg0: i32) -> (i32, i32) {
    %c0_i32 = arith.constant 0 : i32
    %c0_i32_0 = arith.constant 0 : i32
    return %arg0, %c0_i32 : i32, i32
  }
  func.func @transform_1(%arg0: i32) -> (i32, i32) {
    %c0_i32 = arith.constant 0 : i32
    %c0_i32_0 = arith.constant 0 : i32
    return %arg0, %c0_i32 : i32, i32
  }
  func.func @transform_2(%arg0: i32) -> (i32, i32) {
    %c0_i32 = arith.constant 0 : i32
    %c0_i32_0 = arith.constant 0 : i32
    return %arg0, %c0_i32 : i32, i32
  }
  func.func @transform_3(%arg0: i32) -> (i32, i32) {
    %c0_i32 = arith.constant 0 : i32
    %c0_i32_0 = arith.constant 0 : i32
    return %arg0, %c0_i32 : i32, i32
  }
}

</mosaic_0001>

<llo_original>
// kernel: tpu_custom_call.1
$region0: #{tpu_custom_call.1}
  #allocation0 [shape = 'u32[]', space=smem, size = 0x4, offset = 0x4, fixed_abs, tag = 'smem constant byte address 0x4 - core index']
  #allocation1 [shape = 'u32[144,128]{1,0:T(1,128)}', space=vmem, size = 0x12000, scoped, tag = 'internal scratch']
  %s0 = inlined_call_operand.vmem [shape: f32[8,256], index: 0, kind: input, shape index: {}]
  %s1 = inlined_call_operand.vmem [shape: f32[8,1], index: 1, kind: input, shape index: {}]
  %s2 = inlined_call_operand.vmem [shape: f32[8,1], index: 2, kind: input, shape index: {}]
  %s3 = inlined_call_operand.hbm [shape: f32[8,256], index: 3, kind: output, shape index: {}]
  %s4 = sld [smem:[#allocation0]]
  $region22: #{tpu_custom_call.1} parent=0
    _
  %s6 = ssub.s32 1, %s4
  %s7 = scalar_select 0, %s6, %s4
  $region1: #{tpu_custom_call.1} parent=0
    #allocation2 [shape = 'u8[8192]{0}', space=vmem, size = 0x2000, scoped, tag = 'output window, operand 0, single buffered']
    #allocation3 [shape = 's32[1]{0}', space=sflag, size = 0x4, scoped, tag = 'scoped memory for tpu_custom_call.1']
    %8 = vsyncpa [#allocation3], 0
    // Predicated region
    $region2: #{tpu_custom_call.1} parent=1 // pred_check
      _
    $region3: #{tpu_custom_call.1} parent=1 // pred_check_branch
      %10 = sbr.rel (0) target = $region5
    $region4: #{tpu_custom_call.1} parent=1 // pred_region
      _
    $region5: #{tpu_custom_call.1} parent=1 // pred_fallthru
      _
    // Predicated region
    $region6: #{tpu_custom_call.1} parent=1 // pred_check
      _
    $region7: #{tpu_custom_call.1} parent=1 // pred_check_branch
      %12 = sbr.rel (0) target = $region9
    $region8: #{tpu_custom_call.1} parent=1 // pred_region
      _
    $region9: #{tpu_custom_call.1} parent=1 // pred_fallthru
      _
    // Predicated region
    $region10: #{tpu_custom_call.1} parent=1 // pred_check
      _
    $region11: #{tpu_custom_call.1} parent=1 // pred_check_branch
      %14 = sbr.rel (0) target = $region13
    $region12: #{tpu_custom_call.1} parent=1 // pred_region
      _
    $region13: #{tpu_custom_call.1} parent=1 // pred_fallthru
      _
    %v15 = vld [vmem:[%s1] sm:$0xff]
    %v16 = vld [vmem:[%s2] sm:$0xff]
    %v17 = vld [vmem:[%s0] sm:$0xff]
    %v18 = vld [vmem:[%s0 + $0x8] sm:$0xff]
    %v19 = vadd.f32 %v17, %v18
    %20 = vadd.xlane.f32.xlu0 %v19
    %v21 = vpop.xlane.xlu0 %20
    %v22 = vmul.f32 %v21, 0.00390625
    %v23 = vmul.f32 %v17, %v17
    %v24 = vmul.f32 %v18, %v18
    %v25 = vadd.f32 %v23, %v24
    %26 = vadd.xlane.f32.xlu0 %v25
    %v27 = vpop.xlane.xlu0 %26
    %v28 = vmul.f32 %v27, 0.00390625
    %v29 = vmul.f32 %v22, %v22
    %v30 = vsub.f32 %v28, %v29
    %v31 = vmax.f32 %v30, 0.0
    %v32 = vadd.f32 %v31, 1e-05
    %v33 = vrsqrt.pop %v32
    %v34 = vmul.f32 %v33, %v15
    %v35 = vmul.f32 %v22, %v34
    %v36 = vsub.f32 %v16, %v35
    %38 = vset.pattern.permute.xlu0 0
    %39 = vperm.xlu0 %38, %v34
    %v40 = vpop.permute.xlu0 %39
    %v42 = vmul.f32 %v17, %v40
    %v43 = vmul.f32 %v18, %v40
    %45 = vset.pattern.permute.xlu0 0
    %46 = vperm.xlu0 %45, %v36
    %v47 = vpop.permute.xlu0 %46
    %v49 = vadd.f32 %v42, %v47
    %v50 = vadd.f32 %v43, %v47
    %51 = vst [vmem:[#allocation2] sm:$0xff] %v49
    %52 = vst [vmem:[#allocation2 + $0x8] sm:$0xff] %v50
    // Predicated region
    $region14: #{tpu_custom_call.1} parent=1 // pred_check
      _
    $region15: #{tpu_custom_call.1} parent=1 // pred_check_branch
      %54 = sbr.rel (0) target = $region17
    $region16: #{tpu_custom_call.1} parent=1 // pred_region
      %s56 = ssub.s32 256, 256
      %57 = vsyncadd [#allocation3], %s56
      %s59 = sshll.u32 [#allocation2], 4
      %s60 = int_to_ptr.vmem [resolvable:$true] %s59
      %62 = dma.vmem_to_hbm [thread:$0]  %s60, 256, %s3, [#allocation3]
    $region17: #{tpu_custom_call.1} parent=1 // pred_fallthru
      _
    // Predicated region
    $region18: #{tpu_custom_call.1} parent=1 // pred_check
      _
    $region19: #{tpu_custom_call.1} parent=1 // pred_check_branch
      %64 = sbr.rel (0) target = $region21
    $region20: #{tpu_custom_call.1} parent=1 // pred_region
      %65 = dma.done [#allocation3], 256
    $region21: #{tpu_custom_call.1} parent=1 // pred_fallthru
      _
    %66 = vsyncpa [#allocation3], 1

</llo_original>
